<compile_context>
chip_gen: v6e
topology: v6e:2x2x1
jax: 0.10.0
libtpu: 0.0.40
codegen_flags: <defaults>
</compile_context>

<pallas_src>
import functools

import numpy as np

import jax
import jax.numpy as jnp
from jax.experimental import pallas as pl
from jax.experimental.pallas import tpu as pltpu


def _multi_task_loss_kernel(losses_ref, log_vars_ref, out_ref, *,
                            reg_flags, reduction, n_tasks, smem_out):
    # (1, n_tasks) tiles; compute in f32 regardless of input dtype
    # (v5e has no bf16 VPU/EUP -- f32 compute + cast-on-store is right on all gens).
    losses = losses_ref[...].astype(jnp.float32)
    log_vars = log_vars_ref[...].astype(jnp.float32)

    # coeffs = 1 / ((is_regression + 1) * exp(log_vars))
    #        = scale * exp(-log_vars),  scale = 0.5 if regression else 1.0
    inv_var = jnp.exp(-log_vars)                      # single EUP op

    if not any(reg_flags):                            # common default: all False
        coeffs = inv_var
    elif all(reg_flags):
        coeffs = 0.5 * inv_var
    else:
        # Per-lane 0.5/1.0 scale via a constant bit-test: O(1) VALU ops per
        # 32-lane word, no per-flag compares, no bool vreg pile-up.
        lane = jax.lax.broadcasted_iota(jnp.int32, (1, n_tasks), 1)
        n_words = (n_tasks + 31) // 32
        words = []
        for w in range(n_words):
            bits = 0
            for b in range(32):
                i = w * 32 + b
                if i < n_tasks and reg_flags[i]:
                    bits |= (1 << b)
            words.append(bits)
        if n_words == 1:
            word_vec = jnp.uint32(words[0])
            bit_idx = lane.astype(jnp.uint32)
        else:
            word_idx = lane >> 5
            bit_idx = (lane & 31).astype(jnp.uint32)
            word_vec = jnp.full((1, n_tasks), words[0], dtype=jnp.uint32)
            for j in range(1, n_words):
                word_vec = jnp.where(word_idx == j, jnp.uint32(words[j]), word_vec)
        reg_mask = ((word_vec >> bit_idx) & jnp.uint32(1)) == jnp.uint32(1)
        coeffs = jnp.where(reg_mask, jnp.float32(0.5), jnp.float32(1.0)) * inv_var

    v = coeffs * losses + log_vars                    # (1, n_tasks), f32

    if reduction == "none":
        out_ref[...] = v.astype(out_ref.dtype)
    else:
        s = jnp.sum(v)                                # lane reduce (XLU) -> scalar
        if reduction == "mean":
            s = s * (1.0 / n_tasks)
        if smem_out:
            out_ref[0] = s.astype(out_ref.dtype)      # 4-byte SMEM scalar store
        else:
            out_ref[...] = s.reshape(1, 1).astype(out_ref.dtype)


def multi_task_loss(losses, log_vars, is_regression, reduction="none"):
    """losses: (n_tasks,), log_vars: (n_tasks,) f32 param, is_regression: static bools."""
    n_tasks = losses.shape[0]
    # is_regression is module config (set in __init__) -> treat as static.
    reg_flags = tuple(bool(x) for x in np.asarray(is_regression).reshape(-1))
    assert len(reg_flags) == n_tasks

    # Output dtype follows PyTorch promotion of (coeffs*losses + log_vars).
    out_dtype = jnp.promote_types(losses.dtype, log_vars.dtype)

    # No wrapper-side dtype casts: the kernel upcasts to f32 on load, so we
    # avoid separate XLA convert ops (and their HBM round trips) up front.
    losses_2d = losses.reshape(1, n_tasks)
    log_vars_2d = log_vars.reshape(1, n_tasks)

    vec_spec = pl.BlockSpec((1, n_tasks), lambda: (0, 0))

    scalar_reduce = reduction in ("sum", "mean")
    smem_out = scalar_reduce and jnp.dtype(out_dtype).itemsize == 4
    if scalar_reduce:
        if smem_out:
            out_shape = jax.ShapeDtypeStruct((1,), out_dtype)
            out_spec = pl.BlockSpec(memory_space=pltpu.MemorySpace.SMEM)
        else:
            out_shape = jax.ShapeDtypeStruct((1, 1), out_dtype)
            out_spec = pl.BlockSpec((1, 1), lambda: (0, 0))
    else:
        out_shape = jax.ShapeDtypeStruct((1, n_tasks), out_dtype)
        out_spec = vec_spec

    kernel = functools.partial(
        _multi_task_loss_kernel,
        reg_flags=reg_flags,
        reduction=reduction,
        n_tasks=n_tasks,
        smem_out=smem_out,
    )

    out = pl.pallas_call(
        kernel,
        out_shape=out_shape,
        in_specs=[vec_spec, vec_spec],
        out_specs=out_spec,
        # Tell the XLA scheduler this custom call is ~free so it does not
        # serialize surrounding fusions around it.
        cost_estimate=pl.CostEstimate(
            flops=3 * n_tasks,
            transcendentals=n_tasks,
            bytes_accessed=8 * n_tasks + 4,
        ),
    )(losses_2d, log_vars_2d)

    if scalar_reduce:
        return out.reshape(())
    return out.reshape(n_tasks)


def _reference(losses, log_vars, is_regression, reduction):
    # Exact PyTorch math (f32 throughout for this test).
    is_reg = jnp.asarray(is_regression).astype(jnp.float32)
    stds = jnp.exp(log_vars) ** 0.5
    coeffs = 1.0 / ((is_reg + 1.0) * stds**2)
    v = coeffs * losses + log_vars
    if reduction == "sum":
        return v.sum()
    if reduction == "mean":
        return v.mean()
    return v


if __name__ == "__main__":
    key = jax.random.PRNGKey(0)

    # --- default module config: n_tasks = 3, is_regression = [False]*3 ---
    n_tasks = 3
    k_loss, k_lv, k2_loss, k2_lv = jax.random.split(key, 4)
    losses = jax.random.uniform(k_loss, (n_tasks,), dtype=jnp.float32)
    log_vars = 0.3 * jax.random.normal(k_lv, (n_tasks,), dtype=jnp.float32)

    is_regression = np.array([False, False, False])
    for reduction in ("none", "sum", "mean"):
        out = jax.block_until_ready(
            multi_task_loss(losses, log_vars, is_regression, reduction=reduction))
        ref = _reference(losses, log_vars, is_regression, reduction)
        assert jnp.allclose(out, ref, rtol=1e-5, atol=1e-6), (reduction, out, ref)

    # --- mixed-flag config exercises the single-word bit-test path ---
    is_regression_mixed = np.array([False, True, False])
    for reduction in ("none", "sum"):
        out = jax.block_until_ready(
            multi_task_loss(losses, log_vars, is_regression_mixed, reduction=reduction))
        ref = _reference(losses, log_vars, is_regression_mixed, reduction)
        assert jnp.allclose(out, ref, rtol=1e-5, atol=1e-6), (reduction, out, ref)

    # --- larger task count exercises the multi-word (n_tasks > 32) bit-test path ---
    n_big = 40
    losses_b = jax.random.uniform(k2_loss, (n_big,), dtype=jnp.float32)
    log_vars_b = 0.3 * jax.random.normal(k2_lv, (n_big,), dtype=jnp.float32)
    is_regression_big = (np.arange(n_big) % 3 == 1)
    for reduction in ("none", "mean"):
        out = jax.block_until_ready(
            multi_task_loss(losses_b, log_vars_b, is_regression_big, reduction=reduction))
        ref = _reference(losses_b, log_vars_b, is_regression_big, reduction)
        assert jnp.allclose(out, ref, rtol=1e-5, atol=1e-6), (reduction, out, ref)

    print("KERNEL_OK")
</pallas_src>

<mosaic_0001>
module attributes {stable_mosaic.version = 11 : i64} {
  func.func @_multi_task_loss_kernel(%arg0: memref<1x3xf32, #tpu.memory_space<vmem>>, %arg1: memref<1x3xf32, #tpu.memory_space<vmem>>, %arg2: memref<1x3xf32, #tpu.memory_space<vmem>>) attributes {dimension_semantics = [], scalar_prefetch = 0 : i64, scratch_operands = 0 : i64, tpu.core_type = #tpu.core_type<tc>} {
    %c0 = arith.constant 0 : index
    %c0_0 = arith.constant 0 : index
    %0 = vector.load %arg0[%c0, %c0_0] : memref<1x3xf32, #tpu.memory_space<vmem>>, vector<1x3xf32>
    %c0_1 = arith.constant 0 : index
    %c0_2 = arith.constant 0 : index
    %1 = vector.load %arg1[%c0_1, %c0_2] : memref<1x3xf32, #tpu.memory_space<vmem>>, vector<1x3xf32>
    %cst = arith.constant 0.000000e+00 : f32
    %2 = vector.broadcast %cst : f32 to vector<1x3xf32>
    %3 = arith.subf %2, %1 : vector<1x3xf32>
    %4 = math.exp %3 : vector<1x3xf32>
    %5 = arith.mulf %4, %0 : vector<1x3xf32>
    %6 = arith.addf %5, %1 : vector<1x3xf32>
    %c0_3 = arith.constant 0 : index
    %c0_4 = arith.constant 0 : index
    %7 = vector.load %arg2[%c0_3, %c0_4] : memref<1x3xf32, #tpu.memory_space<vmem>>, vector<1x3xf32>
    tpu.vector_store %arg2[%c0_3, %c0_4], %6 {strides = array<i32>} : memref<1x3xf32, #tpu.memory_space<vmem>>, vector<1x3xf32>,
    return
  }
}

</mosaic_0001>

<llo_original>
// kernel: tpu_custom_call.1
$region0: #{tpu_custom_call.1}
  #allocation0 [shape = 'u32[]', space=smem, size = 0x4, offset = 0x4, fixed_abs, tag = 'smem constant byte address 0x4 - core index']
  #allocation1 [shape = 'u32[144,128]{1,0:T(1,128)}', space=vmem, size = 0x12000, scoped, tag = 'internal scratch']
  %s0 = inlined_call_operand.hbm [shape: f32[1,3], index: 0, kind: input, shape index: {}]
  %s1 = inlined_call_operand.vmem [shape: f32[1,3], index: 1, kind: input, shape index: {}]
  %s2 = inlined_call_operand.hbm [shape: f32[1,3], index: 2, kind: output, shape index: {}]
  %s3 = sld [smem:[#allocation0]]
  $region22: #{tpu_custom_call.1} parent=0
    _
  %s5 = ssub.s32 1, %s3
  %s6 = scalar_select 0, %s5, %s3
  $region1: #{tpu_custom_call.1} parent=0
    #allocation2 [shape = 'u8[512]{0}', space=vmem, size = 0x400, scoped, tag = 'input window, operand 0, single buffered']
    #allocation3 [shape = 's32[1]{0}', space=sflag, size = 0x4, scoped, tag = 'scoped memory for tpu_custom_call.1']
    #allocation4 [shape = 's32[1]{0}', space=sflag, size = 0x4, scoped, tag = 'scoped memory for tpu_custom_call.1']
    #allocation5 [shape = 'u8[512]{0}', space=vmem, size = 0x400, scoped, tag = 'output window, operand 0, single buffered']
    %7 = vsyncpa [#allocation3], 0
    %8 = vsyncpa [#allocation4], 0
    // Predicated region
    $region2: #{tpu_custom_call.1} parent=1 // pred_check
      _
    $region3: #{tpu_custom_call.1} parent=1 // pred_check_branch
      %10 = sbr.rel (0) target = $region5
    $region4: #{tpu_custom_call.1} parent=1 // pred_region
      %s12 = ssub.s32 16, 16
      %13 = vsyncadd [#allocation3], %s12
      %s15 = sshll.u32 [#allocation2], 4
      %s16 = int_to_ptr.vmem [resolvable:$true] %s15
      %18 = dma.hbm_to_vmem [thread:$0]  %s0, 16, %s16, [#allocation3]
    $region5: #{tpu_custom_call.1} parent=1 // pred_fallthru
      _
    // Predicated region
    $region6: #{tpu_custom_call.1} parent=1 // pred_check
      _
    $region7: #{tpu_custom_call.1} parent=1 // pred_check_branch
      %20 = sbr.rel (0) target = $region9
    $region8: #{tpu_custom_call.1} parent=1 // pred_region
      _
    $region9: #{tpu_custom_call.1} parent=1 // pred_fallthru
      _
    // Predicated region
    $region10: #{tpu_custom_call.1} parent=1 // pred_check
      _
    $region11: #{tpu_custom_call.1} parent=1 // pred_check_branch
      %22 = sbr.rel (0) target = $region13
    $region12: #{tpu_custom_call.1} parent=1 // pred_region
      %23 = dma.done [#allocation3], 16
    $region13: #{tpu_custom_call.1} parent=1 // pred_fallthru
      _
    %v24 = vld [vmem:[#allocation2] sm:$0x1]
    %v25 = vld [vmem:[%s1] sm:$0x1]
    %v26 = vsub.f32 0.0, %v25
    %v27 = vmul.f32 %v26, 1.442695
    %v28 = vpow.pop %v27
    %v29 = vmul.f32 %v28, %v24
    %v30 = vadd.f32 %v29, %v25
    %vm31 = vcmask 16384
    %32 = vst.msk [vmem:[#allocation5] sm:$0x1] %vm31, %v30
    // Predicated region
    $region14: #{tpu_custom_call.1} parent=1 // pred_check
      _
    $region15: #{tpu_custom_call.1} parent=1 // pred_check_branch
      %34 = sbr.rel (0) target = $region17
    $region16: #{tpu_custom_call.1} parent=1 // pred_region
      %s36 = ssub.s32 16, 16
      %37 = vsyncadd [#allocation4], %s36
      %s39 = sshll.u32 [#allocation5], 4
      %s40 = int_to_ptr.vmem [resolvable:$true] %s39
      %42 = dma.vmem_to_hbm [thread:$0]  %s40, 16, %s2, [#allocation4]
    $region17: #{tpu_custom_call.1} parent=1 // pred_fallthru
      _
    // Predicated region
    $region18: #{tpu_custom_call.1} parent=1 // pred_check
      _
    $region19: #{tpu_custom_call.1} parent=1 // pred_check_branch
      %44 = sbr.rel (0) target = $region21
    $region20: #{tpu_custom_call.1} parent=1 // pred_region
      %45 = dma.done [#allocation4], 16
    $region21: #{tpu_custom_call.1} parent=1 // pred_fallthru
      _
    %46 = vsyncpa [#allocation3], 1
    %47 = vsyncpa [#allocation4], 1

</llo_original>
